<compile_context>
chip_gen: v7x
topology: tpu7x:2x2x1
jax: 0.10.0
libtpu: 0.0.40
codegen_flags: <defaults>
</compile_context>

<pallas_src>
import jax
import jax.numpy as jnp
from jax.experimental import pallas as pl
from jax.experimental.pallas import tpu as pltpu

_LN2 = 0.6931471805599453


def _jsd_kernel(lp_ref, lq_ref, o_ref):
    lp = lp_ref[...].astype(jnp.float32)
    lq = lq_ref[...].astype(jnp.float32)

    # Numerically-stable softmax / log-softmax along the lane (class) axis.
    lp_max = jnp.max(lp, axis=-1, keepdims=True)
    lq_max = jnp.max(lq, axis=-1, keepdims=True)
    lp_sh = lp - lp_max
    lq_sh = lq - lq_max
    ep = jnp.exp(lp_sh)
    eq = jnp.exp(lq_sh)
    sp = jnp.sum(ep, axis=-1, keepdims=True)
    sq = jnp.sum(eq, axis=-1, keepdims=True)

    # Exact reciprocal (approx=True would risk the 1e-5 tolerance).
    p = ep * pl.reciprocal(sp, approx=False)
    q = eq * pl.reciprocal(sq, approx=False)
    log_p = lp_sh - jnp.log(sp)   # per-row scalar log: effectively free on EUP
    log_q = lq_sh - jnp.log(sq)

    # m = log(0.5*(p+q)) = log(p+q) - ln2
    # p*(log_p - m) + q*(log_q - m) = p*log_p + q*log_q - (p+q)*(log(p+q)-ln2)
    pq = p + q
    # Guard pq == 0 (both probabilities underflow): the analytic limit of
    # pq*log(pq) is 0; avoid 0 * (-inf) = NaN by feeding log a safe argument.
    safe_pq = jnp.where(pq > 0, pq, jnp.float32(1.0))
    mix = pq * (jnp.log(safe_pq) - jnp.float32(_LN2))
    term = p * log_p + q * log_q - mix
    js = 0.5 * jnp.sum(term, axis=-1, keepdims=True)
    o_ref[...] = js.astype(o_ref.dtype)


def _vmem_limit_bytes() -> int:
    # Conservative fallback = v7x per-TC physical VMEM (64 MiB); v5e/v6e have 128 MiB.
    default_phys = 64 * 1024 * 1024
    try:
        info = pltpu.get_tpu_info()
        phys = int(getattr(info, "vmem_capacity_bytes", default_phys) or default_phys)
    except Exception:
        phys = default_phys
    # Leave headroom for compiler scratch; never ask for more than 96 MiB.
    return min((phys * 3) // 4, 96 * 1024 * 1024)


def _pick_tm(n_rows: int, d: int, in_itemsize: int, tile_budget: int, sublane: int) -> int:
    # Per-row VMEM bytes: 2 inputs x 2 pipeline buffers + ~4 full-tile f32
    # temporaries (Mosaic streams the rest of the elementwise chain per-vreg).
    bytes_per_row = 2 * 2 * d * in_itemsize + 4 * d * 4
    tm = max(sublane, (tile_budget // bytes_per_row) // sublane * sublane)
    # Never make the block larger than the sublane-rounded row count.
    n_up = ((n_rows + sublane - 1) // sublane) * sublane
    tm = min(tm, n_up)
    # Keep >= ~8 grid steps (>= 4 per v7x TensorCore under 'parallel') so the
    # DMA for tile i+1 overlaps compute of tile i; never drop below one
    # sublane tile.
    if n_up // tm < 8:
        tm_small = (n_up // 8) // sublane * sublane
        if tm_small >= sublane:
            tm = min(tm, tm_small)
    return tm


def jsd(logits_p: jax.Array, logits_q: jax.Array) -> jax.Array:
    assert logits_p.shape == logits_q.shape
    D = logits_p.shape[-1]
    lp2 = logits_p.reshape(-1, D)
    lq2 = logits_q.reshape(-1, D)
    N = lp2.shape[0]

    itemsize = jnp.dtype(lp2.dtype).itemsize
    sublane = max(8, 32 // itemsize)          # 8 f32 / 16 bf16 / 32 int8|fp8
    vmem_limit = _vmem_limit_bytes()
    tile_budget = max(vmem_limit - (4 << 20), vmem_limit // 2)
    tm = _pick_tm(N, D, itemsize, tile_budget, sublane)
    grid = (pl.cdiv(N, tm),)                  # ragged last tile; no jnp.pad HBM copy

    # TODO(synk): for extreme vocab D (f32 D >~ 1M, where even a single sublane
    # tile overflows v7x's 64 MiB VMEM) add a second 'arbitrary' grid axis over
    # D with a two-pass max/sum + accumulate reduction; for realistic vocab
    # sizes the per-input tile is already multi-MiB so DMAs stay efficient.
    cost = pl.CostEstimate(
        flops=12 * N * D,
        transcendentals=3 * N * D,
        bytes_accessed=2 * N * D * itemsize + 4 * N,
    )

    out = pl.pallas_call(
        _jsd_kernel,
        out_shape=jax.ShapeDtypeStruct((N, 1), jnp.float32),
        grid_spec=pltpu.PrefetchScalarGridSpec(
            num_scalar_prefetch=0,
            grid=grid,
            in_specs=[
                pl.BlockSpec((tm, D), lambda i: (i, 0)),
                pl.BlockSpec((tm, D), lambda i: (i, 0)),
            ],
            out_specs=pl.BlockSpec((tm, 1), lambda i: (i, 0)),
        ),
        compiler_params=pltpu.CompilerParams(
            dimension_semantics=("parallel",),
            vmem_limit_bytes=vmem_limit,
        ),
        cost_estimate=cost,
    )(lp2, lq2)
    return out.reshape(N)


def _jsd_reference(logits_p, logits_q):
    p = jax.nn.softmax(logits_p, axis=-1)
    q = jax.nn.softmax(logits_q, axis=-1)
    D = p.shape[-1]
    p = p.reshape(-1, D)
    q = q.reshape(-1, D)
    m = jnp.log(0.5 * (p + q))
    kl_pm = p * (jnp.log(p) - m)
    kl_qm = q * (jnp.log(q) - m)
    return 0.5 * jnp.sum(kl_pm + kl_qm, axis=-1)


if __name__ == "__main__":
    key = jax.random.PRNGKey(0)
    k1, k2 = jax.random.split(key)
    # small shapes: batch=2, seq=8, vocab/classes=32  ->  N = 16 rows
    logits_p = jax.random.normal(k1, (2, 8, 32), dtype=jnp.float32)
    logits_q = jax.random.normal(k2, (2, 8, 32), dtype=jnp.float32)

    out = jsd(logits_p, logits_q)
    out = jax.block_until_ready(out)

    ref = _jsd_reference(logits_p, logits_q)
    assert out.shape == (16,)
    assert jnp.allclose(out, ref, atol=1e-5, rtol=1e-5), (out, ref)
    print("KERNEL_OK")
</pallas_src>

<mosaic_0001>
module attributes {stable_mosaic.version = 11 : i64} {
  func.func @_jsd_kernel(%arg0: i32, %arg1: memref<16x32xf32, #tpu.memory_space<vmem>>, %arg2: memref<16x32xf32, #tpu.memory_space<vmem>>, %arg3: memref<16x1xf32, #tpu.memory_space<vmem>>) attributes {dimension_semantics = [#tpu.dimension_semantics<parallel>], iteration_bounds = array<i64: 1>, scalar_prefetch = 0 : i64, scratch_operands = 0 : i64, tpu.core_type = #tpu.core_type<tc>, window_params = [{transform_indices = @transform_0, window_bounds = array<i64: 16, 32>}, {transform_indices = @transform_1, window_bounds = array<i64: 16, 32>}, {transform_indices = @transform_2, window_bounds = array<i64: 16, 1>}]} {
    %c0 = arith.constant 0 : index
    %c0_0 = arith.constant 0 : index
    %0 = vector.load %arg1[%c0, %c0_0] : memref<16x32xf32, #tpu.memory_space<vmem>>, vector<16x32xf32>
    %c0_1 = arith.constant 0 : index
    %c0_2 = arith.constant 0 : index
    %1 = vector.load %arg2[%c0_1, %c0_2] : memref<16x32xf32, #tpu.memory_space<vmem>>, vector<16x32xf32>
    %cst = arith.constant dense<0xFF800000> : vector<16xf32>
    %2 = vector.multi_reduction <maximumf>, %0, %cst [1] : vector<16x32xf32> to vector<16xf32>
    %3 = vector.shape_cast %2 : vector<16xf32> to vector<16x1xf32>
    %cst_3 = arith.constant dense<0xFF800000> : vector<16xf32>
    %4 = vector.multi_reduction <maximumf>, %1, %cst_3 [1] : vector<16x32xf32> to vector<16xf32>
    %5 = vector.shape_cast %4 : vector<16xf32> to vector<16x1xf32>
    %6 = vector.broadcast %3 : vector<16x1xf32> to vector<16x32xf32>
    %7 = arith.subf %0, %6 : vector<16x32xf32>
    %8 = vector.broadcast %5 : vector<16x1xf32> to vector<16x32xf32>
    %9 = arith.subf %1, %8 : vector<16x32xf32>
    %10 = math.exp %7 : vector<16x32xf32>
    %11 = math.exp %9 : vector<16x32xf32>
    %cst_4 = arith.constant dense<0.000000e+00> : vector<16xf32>
    %12 = vector.multi_reduction <add>, %10, %cst_4 [1] : vector<16x32xf32> to vector<16xf32>
    %13 = vector.shape_cast %12 : vector<16xf32> to vector<16x1xf32>
    %cst_5 = arith.constant dense<0.000000e+00> : vector<16xf32>
    %14 = vector.multi_reduction <add>, %11, %cst_5 [1] : vector<16x32xf32> to vector<16xf32>
    %15 = vector.shape_cast %14 : vector<16xf32> to vector<16x1xf32>
    %16 = tpu.reciprocal %13 : vector<16x1xf32> -> vector<16x1xf32>
    %17 = vector.broadcast %16 : vector<16x1xf32> to vector<16x32xf32>
    %18 = arith.mulf %10, %17 : vector<16x32xf32>
    %19 = tpu.reciprocal %15 : vector<16x1xf32> -> vector<16x1xf32>
    %20 = vector.broadcast %19 : vector<16x1xf32> to vector<16x32xf32>
    %21 = arith.mulf %11, %20 : vector<16x32xf32>
    %22 = math.log %13 : vector<16x1xf32>
    %23 = vector.broadcast %22 : vector<16x1xf32> to vector<16x32xf32>
    %24 = arith.subf %7, %23 : vector<16x32xf32>
    %25 = math.log %15 : vector<16x1xf32>
    %26 = vector.broadcast %25 : vector<16x1xf32> to vector<16x32xf32>
    %27 = arith.subf %9, %26 : vector<16x32xf32>
    %28 = arith.addf %18, %21 : vector<16x32xf32>
    %cst_6 = arith.constant 0.000000e+00 : f32
    %29 = vector.broadcast %cst_6 : f32 to vector<16x32xf32>
    %30 = arith.cmpf ogt, %28, %29 : vector<16x32xf32>
    %cst_7 = arith.constant 1.000000e+00 : f32
    %31 = vector.broadcast %cst_7 : f32 to vector<16x32xf32>
    %32 = arith.select %30, %28, %31 : vector<16x32xi1>, vector<16x32xf32>
    %33 = math.log %32 : vector<16x32xf32>
    %cst_8 = arith.constant 0.693147182 : f32
    %34 = vector.broadcast %cst_8 : f32 to vector<16x32xf32>
    %35 = arith.subf %33, %34 : vector<16x32xf32>
    %36 = arith.mulf %28, %35 : vector<16x32xf32>
    %37 = arith.mulf %18, %24 : vector<16x32xf32>
    %38 = arith.mulf %21, %27 : vector<16x32xf32>
    %39 = arith.addf %37, %38 : vector<16x32xf32>
    %40 = arith.subf %39, %36 : vector<16x32xf32>
    %cst_9 = arith.constant dense<0.000000e+00> : vector<16xf32>
    %41 = vector.multi_reduction <add>, %40, %cst_9 [1] : vector<16x32xf32> to vector<16xf32>
    %42 = vector.shape_cast %41 : vector<16xf32> to vector<16x1xf32>
    %cst_10 = arith.constant 5.000000e-01 : f32
    %43 = vector.broadcast %cst_10 : f32 to vector<16x1xf32>
    %44 = arith.mulf %43, %42 : vector<16x1xf32>
    %c0_11 = arith.constant 0 : index
    %c0_12 = arith.constant 0 : index
    %45 = vector.load %arg3[%c0_11, %c0_12] : memref<16x1xf32, #tpu.memory_space<vmem>>, vector<16x1xf32>
    tpu.vector_store %arg3[%c0_11, %c0_12], %44 {strides = array<i32>} : memref<16x1xf32, #tpu.memory_space<vmem>>, vector<16x1xf32>,
    return
  }
  func.func @transform_0(%arg0: i32) -> (i32, i32) {
    %c0_i32 = arith.constant 0 : i32
    %c0_i32_0 = arith.constant 0 : i32
    return %arg0, %c0_i32 : i32, i32
  }
  func.func @transform_1(%arg0: i32) -> (i32, i32) {
    %c0_i32 = arith.constant 0 : i32
    %c0_i32_0 = arith.constant 0 : i32
    return %arg0, %c0_i32 : i32, i32
  }
  func.func @transform_2(%arg0: i32) -> (i32, i32) {
    %c0_i32 = arith.constant 0 : i32
    %c0_i32_0 = arith.constant 0 : i32
    return %arg0, %c0_i32 : i32, i32
  }
}

</mosaic_0001>

<llo_original>
// kernel: tpu_custom_call.1
$region0: #{tpu_custom_call.1}
  #allocation0 [shape = 'u32[]', space=smem, size = 0x4, offset = 0x4, fixed_abs, tag = 'smem constant byte address 0x4 - core index']
  #allocation1 [shape = 'u32[144,128]{1,0:T(1,128)}', space=vmem, size = 0x12000, scoped, tag = 'internal scratch']
  %s0 = inlined_call_operand.hbm [shape: f32[16,32], index: 0, kind: input, shape index: {}]
  %s1 = inlined_call_operand.hbm [shape: f32[16,32], index: 1, kind: input, shape index: {}]
  %s2 = inlined_call_operand.vmem [shape: f32[16,1], index: 2, kind: output, shape index: {}]
  %s3 = sld [smem:[#allocation0]]
  $region26: #{tpu_custom_call.1} parent=0
    _
  %s5 = ssub.s32 1, %s3
  %s6 = scalar_select 0, %s5, %s3
  $region1: #{tpu_custom_call.1} parent=0
    #allocation2 [shape = 'u8[8192]{0}', space=vmem, size = 0x2000, scoped, tag = 'input window, operand 0, single buffered']
    #allocation3 [shape = 's32[1]{0}', space=sflag, size = 0x4, scoped, tag = 'scoped memory for tpu_custom_call.1']
    #allocation4 [shape = 'u8[8192]{0}', space=vmem, size = 0x2000, scoped, tag = 'input window, operand 1, single buffered']
    #allocation5 [shape = 's32[1]{0}', space=sflag, size = 0x4, scoped, tag = 'scoped memory for tpu_custom_call.1']
    %7 = vsyncpa [#allocation3], 0
    %8 = vsyncpa [#allocation5], 0
    // Predicated region
    $region2: #{tpu_custom_call.1} parent=1 // pred_check
      _
    $region3: #{tpu_custom_call.1} parent=1 // pred_check_branch
      %10 = sbr.rel (0) target = $region5
    $region4: #{tpu_custom_call.1} parent=1 // pred_region
      %s12 = ssub.s32 256, 256
      %13 = vsyncadd [#allocation3], %s12
      %s14 = sshll.u32 [#allocation2], 4
      %s15 = int_to_ptr.vmem [resolvable:$true] %s14
      %20 = dma.hbm_to_vmem [thread:$0]  %s0, 256, %s15, [#allocation3], 128, 128, 8
    $region5: #{tpu_custom_call.1} parent=1 // pred_fallthru
      _
    // Predicated region
    $region6: #{tpu_custom_call.1} parent=1 // pred_check
      _
    $region7: #{tpu_custom_call.1} parent=1 // pred_check_branch
      %22 = sbr.rel (0) target = $region9
    $region8: #{tpu_custom_call.1} parent=1 // pred_region
      %s24 = ssub.s32 256, 256
      %25 = vsyncadd [#allocation5], %s24
      %s26 = sshll.u32 [#allocation4], 4
      %s27 = int_to_ptr.vmem [resolvable:$true] %s26
      %32 = dma.hbm_to_vmem [thread:$0]  %s1, 256, %s27, [#allocation5], 128, 128, 8
    $region9: #{tpu_custom_call.1} parent=1 // pred_fallthru
      _
    // Predicated region
    $region10: #{tpu_custom_call.1} parent=1 // pred_check
      _
    $region11: #{tpu_custom_call.1} parent=1 // pred_check_branch
      %34 = sbr.rel (0) target = $region13
    $region12: #{tpu_custom_call.1} parent=1 // pred_region
      %35 = dma.done [#allocation3], 256
    $region13: #{tpu_custom_call.1} parent=1 // pred_fallthru
      _
    // Predicated region
    $region14: #{tpu_custom_call.1} parent=1 // pred_check
      _
    $region15: #{tpu_custom_call.1} parent=1 // pred_check_branch
      %37 = sbr.rel (0) target = $region17
    $region16: #{tpu_custom_call.1} parent=1 // pred_region
      %38 = dma.done [#allocation5], 256
    $region17: #{tpu_custom_call.1} parent=1 // pred_fallthru
      _
    %v39 = vld [vmem:[#allocation2] sm:$0xff]
    %v40 = vld [vmem:[#allocation2 + $0x8] sm:$0xff]
    %v41 = vld [vmem:[#allocation4] sm:$0xff]
    %v42 = vld [vmem:[#allocation4 + $0x8] sm:$0xff]
    %vm43 = vcmask 261120
    %v44 = vsel %vm43, %v39, -inf
    %45 = vmax.xlane.f32.xlu0 %v44
    %v46 = vpop.xlane.xlu0 %45
    %v47 = vsel %vm43, %v40, -inf
    %48 = vmax.xlane.f32.xlu0 %v47
    %v49 = vpop.xlane.xlu0 %48
    %v50 = vsel %vm43, %v41, -inf
    %51 = vmax.xlane.f32.xlu0 %v50
    %v52 = vpop.xlane.xlu0 %51
    %v53 = vsel %vm43, %v42, -inf
    %54 = vmax.xlane.f32.xlu0 %v53
    %v55 = vpop.xlane.xlu0 %54
    %v56 = vsub.f32 %v39, %v46
    %v57 = vsub.f32 %v40, %v49
    %v58 = vsub.f32 %v41, %v52
    %v59 = vsub.f32 %v42, %v55
    %v60 = vmul.f32 %v56, 1.442695
    %v61 = vpow.pop %v60
    %v62 = vmul.f32 %v57, 1.442695
    %v63 = vpow.pop %v62
    %v64 = vmul.f32 %v58, 1.442695
    %v65 = vpow.pop %v64
    %v66 = vmul.f32 %v59, 1.442695
    %v67 = vpow.pop %v66
    %v68 = vsel %vm43, %v61, 0.0
    %69 = vadd.xlane.f32.xlu0 %v68
    %v70 = vpop.xlane.xlu0 %69
    %v71 = vsel %vm43, %v63, 0.0
    %72 = vadd.xlane.f32.xlu0 %v71
    %v73 = vpop.xlane.xlu0 %72
    %v74 = vsel %vm43, %v65, 0.0
    %75 = vadd.xlane.f32.xlu0 %v74
    %v76 = vpop.xlane.xlu0 %75
    %v77 = vsel %vm43, %v67, 0.0
    %78 = vadd.xlane.f32.xlu0 %v77
    %v79 = vpop.xlane.xlu0 %78
    %v80 = vrcp.pop %v70
    %v81 = vrcp.pop %v73
    %v82 = vmul.f32 %v61, %v80
    %v83 = vmul.f32 %v63, %v81
    %v84 = vrcp.pop %v76
    %v85 = vrcp.pop %v79
    %v86 = vmul.f32 %v65, %v84
    %v87 = vmul.f32 %v67, %v85
    %v88 = vlog2.pop %v70
    %v89 = vmul.f32 %v88, 0.6931472
    %v90 = vlog2.pop %v73
    %v91 = vmul.f32 %v90, 0.6931472
    %v92 = vsub.f32 %v56, %v89
    %v93 = vsub.f32 %v57, %v91
    %v94 = vlog2.pop %v76
    %v95 = vmul.f32 %v94, 0.6931472
    %v96 = vlog2.pop %v79
    %v97 = vmul.f32 %v96, 0.6931472
    %v98 = vsub.f32 %v58, %v95
    %v99 = vsub.f32 %v59, %v97
    %v100 = vadd.f32 %v82, %v86
    %v101 = vadd.f32 %v83, %v87
    %vm102 = vcmp.gt.f32.partialorder %v100, 0.0
    %vm103 = vcmp.gt.f32.partialorder %v101, 0.0
    %v104 = vsel %vm102, %v100, 1.0
    %v105 = vsel %vm103, %v101, 1.0
    %v106 = vlog2.pop %v104
    %v107 = vmul.f32 %v106, 0.6931472
    %v108 = vlog2.pop %v105
    %v109 = vmul.f32 %v108, 0.6931472
    %v110 = vsub.f32 %v107, 0.6931472
    %v111 = vsub.f32 %v109, 0.6931472
    %v112 = vmul.f32 %v100, %v110
    %v113 = vmul.f32 %v101, %v111
    %v114 = vmul.f32 %v82, %v92
    %v115 = vmul.f32 %v83, %v93
    %v116 = vmul.f32 %v86, %v98
    %v117 = vmul.f32 %v87, %v99
    %v118 = vadd.f32 %v114, %v116
    %v119 = vadd.f32 %v115, %v117
    %v120 = vsub.f32 %v118, %v112
    %v121 = vsub.f32 %v119, %v113
    %v122 = vsel %vm43, %v120, 0.0
    %123 = vadd.xlane.f32.xlu0 %v122
    %v124 = vpop.xlane.xlu0 %123
    %v125 = vsel %vm43, %v121, 0.0
    %126 = vadd.xlane.f32.xlu0 %v125
    %v127 = vpop.xlane.xlu0 %126
    %v128 = vmul.f32 %v124, 0.5
    %v129 = vmul.f32 %v127, 0.5
    %vm130 = vcmask 7168
    %131 = vst.msk [vmem:[%s2] sm:$0xff] %vm130, %v128
    %132 = vst.msk [vmem:[%s2 + $0x8] sm:$0xff] %vm130, %v129
    // Predicated region
    $region18: #{tpu_custom_call.1} parent=1 // pred_check
      _
    $region19: #{tpu_custom_call.1} parent=1 // pred_check_branch
      %134 = sbr.rel (0) target = $region21
    $region20: #{tpu_custom_call.1} parent=1 // pred_region
      _
    $region21: #{tpu_custom_call.1} parent=1 // pred_fallthru
      _
    // Predicated region
    $region22: #{tpu_custom_call.1} parent=1 // pred_check
      _
    $region23: #{tpu_custom_call.1} parent=1 // pred_check_branch
      %136 = sbr.rel (0) target = $region25
    $region24: #{tpu_custom_call.1} parent=1 // pred_region
      _
    $region25: #{tpu_custom_call.1} parent=1 // pred_fallthru
      _
    %137 = vsyncpa [#allocation3], 1
    %138 = vsyncpa [#allocation5], 1

</llo_original>
